<compile_context>
chip_gen: v6e
topology: v6e:2x2x1
jax: 0.10.0
libtpu: 0.0.40
codegen_flags: <defaults>
</compile_context>

<pallas_src>
import jax
import jax.numpy as jnp
from jax.experimental import pallas as pl
from jax.experimental.pallas import tpu as pltpu


def _round_up(x, m):
    return ((x + m - 1) // m) * m


def _round_down(x, m):
    return (x // m) * m


def _patch_embed_kernel(x_ref, w_ref, b_ref, o_ref):
    # x_ref: (tm, K)   patch rows (streamed over i, constant over j)
    # w_ref: (K, te)   projection weight column-tile (streamed over j)
    # b_ref: (1, te)   bias column-tile, already f32
    # o_ref: (tm, te)
    acc = jnp.dot(x_ref[...], w_ref[...], preferred_element_type=jnp.float32)
    o_ref[...] = (acc + b_ref[...]).astype(o_ref.dtype)


def _pick_tm(N, min_itemsize):
    """Row tile: <=512, >=2 grid steps when N permits, sublane-legal."""
    sub = {4: 8, 2: 16, 1: 32}.get(min_itemsize, 8)
    tm = 512
    # Keep >= 2 grid steps so a 2-TensorCore chip (v7x) can split the work.
    tm = min(tm, _round_up(pl.cdiv(N, 2), sub))
    tm = max(tm, sub)
    if tm >= 128:
        tm = _round_down(tm, 128)
    else:
        tm = _round_up(tm, sub)
    return int(tm)


def _pick_te(E):
    """Column tile over the embed dim: 128-aligned, ~512-640, divides E if possible."""
    if E <= 512:
        return int(E)
    for te in (512, 640, 384, 768, 256, 128):
        if E % te == 0:
            return te
    return 512


def _vmem_limit_bytes(tm, te, K, in_it, w_it, out_it):
    """Honest double-buffered footprint incl. f32 acc and lane padding."""
    K_lanes = _round_up(max(K, 1), 128)     # (tm, K) occupies >=128 lanes
    te_lanes = _round_up(max(te, 1), 128)
    K_sub = _round_up(max(K, 1), 8)
    x_blk = tm * K_lanes * in_it
    w_blk = K_sub * te_lanes * w_it
    b_blk = 8 * te_lanes * 4
    o_blk = tm * te_lanes * out_it
    acc_blk = tm * te_lanes * 4             # f32 matmul intermediate
    needed = 2 * (x_blk + w_blk + b_blk + o_blk) + acc_blk
    try:
        vmem_cap = int(getattr(pltpu.get_tpu_info(),
                               "vmem_capacity_bytes", 64 << 20))
    except Exception:
        vmem_cap = 64 << 20                 # conservative (v7x-sized) fallback
    return int(min(int(0.85 * vmem_cap), max(needed + (8 << 20), 32 << 20)))


def cogvideox_patch_embed(image_embeds, weight, bias, patch_size, out_dtype=None):
    """image_embeds: (B, F, C, H, W)
       weight:       (E, C, p, p)   -- torch Conv2d layout
       bias:         (E,)
       out_dtype:    optional (e.g. jnp.bfloat16 to halve the output writeback)
       returns:      (B, F*Hp*Wp, E)
    """
    B, F, C, H, W = image_embeds.shape
    E = weight.shape[0]
    p = patch_size
    Hp, Wp = H // p, W // p
    K = C * p * p
    N = B * F * Hp * Wp
    out_dtype = image_embeds.dtype if out_dtype is None else out_dtype

    # --- glue: patchify (XLA reshape/transpose; ~2K/(K+E) of kernel traffic) ---
    # (B, F, C, Hp, p, Wp, p) -> (B, F, Hp, Wp, C, p, p) -> (N, K)
    x = image_embeds.reshape(B, F, C, Hp, p, Wp, p)
    x = x.transpose(0, 1, 3, 5, 2, 4, 6).reshape(N, K)

    # Conv2d weight (E, C, p, p) -> (K, E) with K ordered (c, kh, kw)
    w = weight.reshape(E, K).T
    b = bias.reshape(1, E).astype(jnp.float32)   # pre-cast: epilogue is add+cast only

    in_it = jnp.dtype(x.dtype).itemsize
    w_it = jnp.dtype(w.dtype).itemsize
    out_it = jnp.dtype(out_dtype).itemsize

    tm = _pick_tm(N, min(in_it, out_it))
    te = _pick_te(E)
    vmem_limit = _vmem_limit_bytes(tm, te, K, in_it, w_it, out_it)

    # Ragged last tiles (N % tm, E % te) are handled by Pallas'
    # non-divisible-block masking: OOB input rows only feed dropped outputs.
    grid = (pl.cdiv(N, tm), pl.cdiv(E, te))   # E axis innermost -> x not re-DMAed

    cost = pl.CostEstimate(
        flops=2 * N * K * E,
        transcendentals=0,
        bytes_accessed=(x.size * in_it + w.size * w_it + b.size * 4
                        + N * E * out_it),
    )

    out = pl.pallas_call(
        _patch_embed_kernel,
        out_shape=jax.ShapeDtypeStruct((N, E), out_dtype),
        grid_spec=pltpu.PrefetchScalarGridSpec(
            num_scalar_prefetch=0,
            grid=grid,
            in_specs=[
                pl.BlockSpec((tm, K), lambda i, j: (i, 0)),   # patch rows
                pl.BlockSpec((K, te), lambda i, j: (0, j)),   # weight col-tile
                pl.BlockSpec((1, te), lambda i, j: (0, j)),   # bias col-tile
            ],
            out_specs=pl.BlockSpec((tm, te), lambda i, j: (i, j)),
        ),
        compiler_params=pltpu.CompilerParams(
            dimension_semantics=("parallel", "parallel"),
            vmem_limit_bytes=vmem_limit),
        cost_estimate=cost,
    )(x, w, b)

    return out.reshape(B, F * Hp * Wp, E)


def _reference(image_embeds, weight, bias, patch_size):
    """Pure-JAX reference mirroring the PyTorch forward (for a sanity check)."""
    B, F, C, H, W = image_embeds.shape
    E = weight.shape[0]
    p = patch_size
    Hp, Wp = H // p, W // p
    x = image_embeds.reshape(B * F, C, H, W)
    y = jax.lax.conv_general_dilated(
        x, weight, window_strides=(p, p), padding="VALID",
        dimension_numbers=("NCHW", "OIHW", "NCHW"))
    y = y + bias.reshape(1, E, 1, 1)
    y = y.reshape(B, F, E, Hp * Wp)          # flatten(3)
    y = y.transpose(0, 1, 3, 2)              # transpose(2, 3)
    return y.reshape(B, F * Hp * Wp, E)      # flatten(1, 2)


if __name__ == "__main__":
    # Small, module-consistent shapes.
    patch_size = 2
    in_channels = 4
    embed_dim = 32
    batch, num_frames, height, width = 2, 2, 16, 16

    key = jax.random.PRNGKey(0)
    k_x, k_w, k_b = jax.random.split(key, 3)

    image_embeds = jax.random.normal(
        k_x, (batch, num_frames, in_channels, height, width), dtype=jnp.float32)
    weight = jax.random.normal(
        k_w, (embed_dim, in_channels, patch_size, patch_size),
        dtype=jnp.float32) * 0.02
    bias = jax.random.normal(k_b, (embed_dim,), dtype=jnp.float32) * 0.02

    out = cogvideox_patch_embed(image_embeds, weight, bias, patch_size)
    out = jax.block_until_ready(out)

    ref = _reference(image_embeds, weight, bias, patch_size)
    assert out.shape == ref.shape, (out.shape, ref.shape)
    assert jnp.allclose(out, ref, atol=1e-4, rtol=1e-4), "mismatch vs reference"

    print("KERNEL_OK")
</pallas_src>

<mosaic_0001>
module attributes {stable_mosaic.version = 11 : i64} {
  func.func @_patch_embed_kernel(%arg0: i32, %arg1: i32, %arg2: memref<128x16xf32, #tpu.memory_space<vmem>>, %arg3: memref<16x32xf32, #tpu.memory_space<vmem>>, %arg4: memref<1x32xf32, #tpu.memory_space<vmem>>, %arg5: memref<128x32xf32, #tpu.memory_space<vmem>>) attributes {dimension_semantics = [#tpu.dimension_semantics<parallel>, #tpu.dimension_semantics<parallel>], iteration_bounds = array<i64: 2, 1>, scalar_prefetch = 0 : i64, scratch_operands = 0 : i64, tpu.core_type = #tpu.core_type<tc>, window_params = [{transform_indices = @transform_0, window_bounds = array<i64: 128, 16>}, {transform_indices = @transform_1, window_bounds = array<i64: 16, 32>}, {transform_indices = @transform_2, window_bounds = array<i64: 1, 32>}, {transform_indices = @transform_3, window_bounds = array<i64: 128, 32>}]} {
    %c0 = arith.constant 0 : index
    %c0_0 = arith.constant 0 : index
    %0 = vector.load %arg2[%c0, %c0_0] : memref<128x16xf32, #tpu.memory_space<vmem>>, vector<128x16xf32>
    %c0_1 = arith.constant 0 : index
    %c0_2 = arith.constant 0 : index
    %1 = vector.load %arg3[%c0_1, %c0_2] : memref<16x32xf32, #tpu.memory_space<vmem>>, vector<16x32xf32>
    %cst = arith.constant dense<0.000000e+00> : vector<128x32xf32>
    %2 = tpu.matmul %0, %1, %cst {dimension_numbers = #tpu.dot_dimension_numbers<[1], [0], [0], [1], [0, 0, 1, 1], [], []>} : vector<128x16xf32>, vector<16x32xf32>, vector<128x32xf32> -> vector<128x32xf32>
    %c0_3 = arith.constant 0 : index
    %c0_4 = arith.constant 0 : index
    %3 = vector.load %arg4[%c0_3, %c0_4] : memref<1x32xf32, #tpu.memory_space<vmem>>, vector<1x32xf32>
    %4 = vector.broadcast %3 : vector<1x32xf32> to vector<128x32xf32>
    %5 = arith.addf %2, %4 : vector<128x32xf32>
    %c0_5 = arith.constant 0 : index
    %c0_6 = arith.constant 0 : index
    %6 = vector.load %arg5[%c0_5, %c0_6] : memref<128x32xf32, #tpu.memory_space<vmem>>, vector<128x32xf32>
    tpu.vector_store %arg5[%c0_5, %c0_6], %5 {strides = array<i32>} : memref<128x32xf32, #tpu.memory_space<vmem>>, vector<128x32xf32>,
    return
  }
  func.func @transform_0(%arg0: i32, %arg1: i32) -> (i32, i32) {
    %c0_i32 = arith.constant 0 : i32
    %c0_i32_0 = arith.constant 0 : i32
    return %arg0, %c0_i32 : i32, i32
  }
  func.func @transform_1(%arg0: i32, %arg1: i32) -> (i32, i32) {
    %c0_i32 = arith.constant 0 : i32
    %c0_i32_0 = arith.constant 0 : i32
    return %c0_i32, %arg1 : i32, i32
  }
  func.func @transform_2(%arg0: i32, %arg1: i32) -> (i32, i32) {
    %c0_i32 = arith.constant 0 : i32
    %c0_i32_0 = arith.constant 0 : i32
    return %c0_i32, %arg1 : i32, i32
  }
  func.func @transform_3(%arg0: i32, %arg1: i32) -> (i32, i32) {
    %c0_i32 = arith.constant 0 : i32
    return %arg0, %arg1 : i32, i32
  }
}

</mosaic_0001>

<llo_original>
// kernel: tpu_custom_call.1
$region0: #{tpu_custom_call.1}
  #allocation0 [shape = 'u32[]', space=smem, size = 0x4, offset = 0x4, fixed_abs, tag = 'smem constant byte address 0x4 - core index']
  #allocation1 [shape = 'u32[144,128]{1,0:T(1,128)}', space=vmem, size = 0x12000, scoped, tag = 'internal scratch']
  %s0 = inlined_call_operand.vmem [shape: f32[256,16], index: 0, kind: input, shape index: {}]
  %s1 = inlined_call_operand.vmem [shape: f32[16,32], index: 1, kind: input, shape index: {}]
  %s2 = inlined_call_operand.vmem [shape: f32[1,32], index: 2, kind: input, shape index: {}]
  %s3 = inlined_call_operand.vmem [shape: f32[256,32], index: 3, kind: output, shape index: {}]
  %s4 = sld [smem:[#allocation0]]
  $region45: #{tpu_custom_call.1} parent=0
    _
  %s6 = ssub.s32 1, %s4
  %s7 = scalar_select 0, %s6, %s4
  loop: start=0, step=1, limit=4
  $region2: #{tpu_custom_call.1} parent=0 // loop_pre_header
    _
  $region3: #{tpu_custom_call.1} parent=0 // loop_header
    %s9 = sphi 0, %s13
    %p10 = scmp.ge.s32.totalorder %s9, 4
    %s16 = sphi 0, %s28
    %s17 = sphi 0, %s24
    %s18 = sphi 0, %s16
    %s19 = sphi 0, %s17
    %s20 = sphi 0, %s18
    %s21 = sphi 0, %s19
    %s31 = sphi 0, %s33
    %s34 = sphi 0, %s31
    %s35 = sphi 0, %s34
    %s51 = sphi 0, %s35
    %s57 = sphi 0, %s59
    %s60 = sphi 0, %s57
    %s61 = sphi 0, %s60
    %s77 = sphi 0, %s61
    %s83 = sphi 0, %s85
    %s86 = sphi 0, %s83
    %s87 = sphi 0, %s86
    %s103 = sphi 0, %s87
    %s111 = sphi 0, %s113
    %s114 = sphi 0, %s111
    %s115 = sphi 0, %s114
    %s131 = sphi 0, %s115
  $region4: #{tpu_custom_call.1} parent=0 // loop_header_branch
    %12 = sbr.rel (%p10) target = $region8
  $region5: #{tpu_custom_call.1} parent=0 // loop_body
    %s14 = ssub.s32 %s9, 1
    %s15 = ssub.s32 %s9, 2
    %s22 = sadd.s32 1, %s17
    %p23 = scmp.ge.s32.totalorder %s22, 1
    %s24 = scalar_select %p23, 0, %s22
    %s25 = sadd.s32 1, %s16
    %s26 = scalar_select %p23, %s25, %s16
    %p27 = scmp.ge.s32.totalorder %s26, 2
    %s28 = scalar_select %p27, 0, %s26
    %s29 = ssub.s32 %s16, %s28
    %p30 = scmp.eq.s32.totalorder %s29, 0
    %s32 = sadd.s32 %s31, 1
    %s33 = scalar_select %p30, %s31, %s32
    %p36 = pneg %p30
    %p37 = scmp.eq.s32.totalorder %s9, 1
    %p38 = por %p36, %p37
    %p39 = scmp.ne.s32.totalorder %s31, %s34
    %p40 = scmp.eq.s32.totalorder %s9, 0
    %p41 = por %p39, %p40
    %p42 = scmp.ne.s32.totalorder %s31, %s34
    %p43 = scmp.eq.s32.totalorder %s14, 1
    %p44 = por %p42, %p43
    %p45 = scmp.ne.s32.totalorder %s34, %s35
    %p46 = scmp.eq.s32.totalorder %s14, 0
    %p47 = por %p45, %p46
    %p48 = scmp.ne.s32.totalorder %s34, %s35
    %p49 = scmp.eq.s32.totalorder %s15, 1
    %p50 = por %p48, %p49
    %p52 = scmp.ne.s32.totalorder %s35, %s51
    %p53 = scmp.eq.s32.totalorder %s15, 0
    %p54 = por %p52, %p53
    %s55 = ssub.s32 %s17, %s24
    %p56 = scmp.eq.s32.totalorder %s55, 0
    %s58 = sadd.s32 %s57, 1
    %s59 = scalar_select %p56, %s57, %s58
    %p62 = pneg %p56
    %p63 = scmp.eq.s32.totalorder %s9, 1
    %p64 = por %p62, %p63
    %p65 = scmp.ne.s32.totalorder %s57, %s60
    %p66 = scmp.eq.s32.totalorder %s9, 0
    %p67 = por %p65, %p66
    %p68 = scmp.ne.s32.totalorder %s57, %s60
    %p69 = scmp.eq.s32.totalorder %s14, 1
    %p70 = por %p68, %p69
    %p71 = scmp.ne.s32.totalorder %s60, %s61
    %p72 = scmp.eq.s32.totalorder %s14, 0
    %p73 = por %p71, %p72
    %p74 = scmp.ne.s32.totalorder %s60, %s61
    %p75 = scmp.eq.s32.totalorder %s15, 1
    %p76 = por %p74, %p75
    %p78 = scmp.ne.s32.totalorder %s61, %s77
    %p79 = scmp.eq.s32.totalorder %s15, 0
    %p80 = por %p78, %p79
    %s81 = ssub.s32 %s17, %s24
    %p82 = scmp.eq.s32.totalorder %s81, 0
    %s84 = sadd.s32 %s83, 1
    %s85 = scalar_select %p82, %s83, %s84
    %p88 = pneg %p82
    %p89 = scmp.eq.s32.totalorder %s9, 1
    %p90 = por %p88, %p89
    %p91 = scmp.ne.s32.totalorder %s83, %s86
    %p92 = scmp.eq.s32.totalorder %s9, 0
    %p93 = por %p91, %p92
    %p94 = scmp.ne.s32.totalorder %s83, %s86
    %p95 = scmp.eq.s32.totalorder %s14, 1
    %p96 = por %p94, %p95
    %p97 = scmp.ne.s32.totalorder %s86, %s87
    %p98 = scmp.eq.s32.totalorder %s14, 0
    %p99 = por %p97, %p98
    %p100 = scmp.ne.s32.totalorder %s86, %s87
    %p101 = scmp.eq.s32.totalorder %s15, 1
    %p102 = por %p100, %p101
    %p104 = scmp.ne.s32.totalorder %s87, %s103
    %p105 = scmp.eq.s32.totalorder %s15, 0
    %p106 = por %p104, %p105
    %s107 = ssub.s32 %s16, %s28
    %s108 = ssub.s32 %s17, %s24
    %s109 = sor.u32 %s107, %s108
    %p110 = scmp.eq.s32.totalorder %s109, 0
    %s112 = sadd.s32 %s111, 1
    %s113 = scalar_select %p110, %s111, %s112
    %p116 = pneg %p110
    %p117 = scmp.eq.s32.totalorder %s9, 1
    %p118 = por %p116, %p117
    %p119 = scmp.ne.s32.totalorder %s111, %s114
    %p120 = scmp.eq.s32.totalorder %s9, 0
    %p121 = por %p119, %p120
    %p122 = scmp.ne.s32.totalorder %s111, %s114
    %p123 = scmp.eq.s32.totalorder %s14, 1
    %p124 = por %p122, %p123
    %p125 = scmp.ne.s32.totalorder %s114, %s115
    %p126 = scmp.eq.s32.totalorder %s14, 0
    %p127 = por %p125, %p126
    %p128 = scmp.ne.s32.totalorder %s114, %s115
    %p129 = scmp.eq.s32.totalorder %s15, 1
    %p130 = por %p128, %p129
    %p132 = scmp.ne.s32.totalorder %s115, %s131
    %p133 = scmp.eq.s32.totalorder %s15, 0
    %p134 = por %p132, %p133
    %p135 = scmp.le.s32.totalorder 1, %s9
    %p136 = scmp.lt.s32.totalorder %s9, 3
    %p137 = pnand %p135, %p136
    %p138 = pneg %p137
    // Predicated region
    $region9: #{tpu_custom_call.1} parent=5 // pred_check
      _
    $region10: #{tpu_custom_call.1} parent=5 // pred_check_branch
      %140 = sbr.rel (%p137) target = $region12
    $region11: #{tpu_custom_call.1} parent=5 // pred_region
      %s141 = ssub.s32 %s9, 1
      // Predicated region
      $region13: #{tpu_custom_call.1} parent=11 // pred_check
        %p142 = pneg %p73
      $region14: #{tpu_custom_call.1} parent=11 // pred_check_branch
        %144 = sbr.rel (%p142) target = $region16
      $region15: #{tpu_custom_call.1} parent=11 // pred_region
        %p145 = scmp.lt.s32.totalorder %s19, 0
        %s146 = scalar_select %p145, %s19, 0
        %s147 = smul.addr %s146, 8
        %s148 = scalar_lea.vmem %s1, %s147
      $region16: #{tpu_custom_call.1} parent=11 // pred_fallthru
        _
      // Predicated region
      $region17: #{tpu_custom_call.1} parent=11 // pred_check
        %p149 = pneg %p99
      $region18: #{tpu_custom_call.1} parent=11 // pred_check_branch
        %151 = sbr.rel (%p149) target = $region20
      $region19: #{tpu_custom_call.1} parent=11 // pred_region
        %p152 = scmp.lt.s32.totalorder %s19, 0
        %s153 = scalar_select %p152, %s19, 0
        %s154 = scalar_lea.vmem %s2, %s153
      $region20: #{tpu_custom_call.1} parent=11 // pred_fallthru
        _
    $region12: #{tpu_custom_call.1} parent=5 // pred_fallthru
      _
    %p155 = scmp.lt.s32.totalorder %s9, 2
    // Predicated region
    $region21: #{tpu_custom_call.1} parent=5 // pred_check
      %p156 = pneg %p155
    $region22: #{tpu_custom_call.1} parent=5 // pred_check_branch
      %158 = sbr.rel (%p156) target = $region24
    $region23: #{tpu_custom_call.1} parent=5 // pred_region
      // Predicated region
      $region25: #{tpu_custom_call.1} parent=23 // pred_check
        %p159 = pneg %p41
      $region26: #{tpu_custom_call.1} parent=23 // pred_check_branch
        %161 = sbr.rel (%p159) target = $region28
      $region27: #{tpu_custom_call.1} parent=23 // pred_region
        %s162 = smul.u32 16, %s16
        %p163 = scmp.lt.s32.totalorder %s162, 31
        %s164 = scalar_select %p163, %s162, 31
        %s165 = smul.addr %s164, 8
        %s166 = scalar_lea.vmem %s0, %s165
        %s167 = smul.u32 16, %s16
      $region28: #{tpu_custom_call.1} parent=23 // pred_fallthru
        _
    $region24: #{tpu_custom_call.1} parent=5 // pred_fallthru
      _
    %p168 = scmp.le.s32.totalorder 1, %s9
    %p169 = scmp.lt.s32.totalorder %s9, 3
    %p170 = pnand %p168, %p169
    %p171 = pneg %p170
    // Predicated region
    $region29: #{tpu_custom_call.1} parent=5 // pred_check
      _
    $region30: #{tpu_custom_call.1} parent=5 // pred_check_branch
      %173 = sbr.rel (%p170) target = $region32
    $region31: #{tpu_custom_call.1} parent=5 // pred_region
      %s174 = ssub.s32 %s9, 1
      %s175 = smul.u32 16, %s18
      %p176 = scmp.lt.s32.totalorder %s175, 31
      %s177 = scalar_select %p176, %s175, 31
      %s178 = smul.addr %s177, 8
      %s179 = scalar_lea.vmem %s0, %s178
      %p180 = pneg %p47
      %p181 = pneg %p44
      %p182 = scmp.lt.s32.totalorder %s19, 0
      %s183 = scalar_select %p182, %s19, 0
      %s184 = smul.addr %s183, 8
      %s185 = scalar_lea.vmem %s1, %s184
      %p186 = pneg %p73
      %p187 = pneg %p70
      %p188 = scmp.lt.s32.totalorder %s19, 0
      %s189 = scalar_select %p188, %s19, 0
      %s190 = scalar_lea.vmem %s2, %s189
      %p191 = pneg %p99
      %p192 = pneg %p96
      %p193 = pneg %p127
      %p194 = pneg %p124
      %s195 = smul.u32 16, %s18
      %p196 = scmp.lt.s32.totalorder %s195, 31
      %s197 = scalar_select %p196, %s195, 31
      %p198 = scmp.lt.s32.totalorder %s19, 0
      %s199 = scalar_select %p198, %s19, 0
      %s200 = sadd.s32 %s199, %s197
      %s201 = smul.addr %s200, 8
      %s202 = scalar_lea.vmem %s3, %s201
      %s203 = smul.u32 16, %s18
      %p204 = scmp.lt.s32.totalorder %s203, 31
      %s205 = scalar_select %p204, %s203, 31
      %s206 = smul.addr %s205, 8
      %s207 = scalar_lea.vmem %s0, %s206
      %s208 = smul.u32 16, %s18
      %p209 = scmp.lt.s32.totalorder %s19, 0
      %s210 = scalar_select %p209, %s19, 0
      %s211 = smul.addr %s210, 8
      %s212 = scalar_lea.vmem %s1, %s211
      %p213 = scmp.lt.s32.totalorder %s19, 0
      %s214 = scalar_select %p213, %s19, 0
      %s215 = scalar_lea.vmem %s2, %s214
      %s216 = smul.u32 16, %s18
      %p217 = scmp.lt.s32.totalorder %s216, 31
      %s218 = scalar_select %p217, %s216, 31
      %p219 = scmp.lt.s32.totalorder %s19, 0
      %s220 = scalar_select %p219, %s19, 0
      %s221 = sadd.s32 %s220, %s218
      %s222 = smul.addr %s221, 8
      %s223 = scalar_lea.vmem %s3, %s222
      %s224 = smul.u32 16, %s18
      %v225 = vld [vmem:[%s207] sm:$0xff]
      %v226 = vld [vmem:[%s207 + $0x8] sm:$0xff]
      %v227 = vld [vmem:[%s207 + $0x10] sm:$0xff]
      %v228 = vld [vmem:[%s207 + $0x18] sm:$0xff]
      %v229 = vld [vmem:[%s207 + $0x20] sm:$0xff]
      %v230 = vld [vmem:[%s207 + $0x28] sm:$0xff]
      %v231 = vld [vmem:[%s207 + $0x30] sm:$0xff]
      %v232 = vld [vmem:[%s207 + $0x38] sm:$0xff]
      %v233 = vld [vmem:[%s207 + $0x40] sm:$0xff]
      %v234 = vld [vmem:[%s207 + $0x48] sm:$0xff]
      %v235 = vld [vmem:[%s207 + $0x50] sm:$0xff]
      %v236 = vld [vmem:[%s207 + $0x58] sm:$0xff]
      %v237 = vld [vmem:[%s207 + $0x60] sm:$0xff]
      %v238 = vld [vmem:[%s207 + $0x68] sm:$0xff]
      %v239 = vld [vmem:[%s207 + $0x70] sm:$0xff]
      %v240 = vld [vmem:[%s207 + $0x78] sm:$0xff]
      %v241 = vld [vmem:[%s212] sm:$0xff]
      %v242 = vld [vmem:[%s212 + $0x8] sm:$0xff]
      %v243 = vld [vmem:[%s215] sm:$0x1]
      %v245 = vlaneseq
      %v246 = vshrl.u32 %v245, 7
      %v247 = vsub.s32 0, %v246
      %v248 = vrot.slane %v243, %v247
      %vm250 = vcmask 130048
      %v252 = vsel %vm250, %v225, 0
      %v255 = vsel %vm250, %v226, 0
      %v258 = vsel %vm250, %v227, 0
      %v261 = vsel %vm250, %v228, 0
      %v264 = vsel %vm250, %v229, 0
      %v267 = vsel %vm250, %v230, 0
      %v270 = vsel %vm250, %v231, 0
      %v273 = vsel %vm250, %v232, 0
      %v276 = vsel %vm250, %v233, 0
      %v279 = vsel %vm250, %v234, 0
      %v282 = vsel %vm250, %v235, 0
      %v285 = vsel %vm250, %v236, 0
      %v288 = vsel %vm250, %v237, 0
      %v291 = vsel %vm250, %v238, 0
      %v294 = vsel %vm250, %v239, 0
      %v297 = vsel %vm250, %v240, 0
      %299 = vmatprep.subr.mxu0 0.0
      %300 = vmatpush1.msra.mxu0 0.0
      %301 = vmatprep.subr.mxu0 0.0
      %302 = vmatpush1.msra.mxu0 0.0
      %303 = vmatprep.subr.mxu0 0.0
      %304 = vmatpush1.msra.mxu0 0.0
      %305 = vmatprep.subr.mxu0 0.0
      %306 = vmatpush1.msra.mxu0 0.0
      %307 = vmatprep.subr.mxu0 0.0
      %308 = vmatpush1.msra.mxu0 0.0
      %309 = vmatprep.subr.mxu0 0.0
      %310 = vmatpush1.msra.mxu0 0.0
      %311 = vmatprep.subr.mxu0 0.0
      %312 = vmatpush1.msra.mxu0 0.0
      %313 = vmatprep.subr.mxu0 0.0
      %314 = vmatpush1.msra.mxu0 0.0
      %315 = vmatprep.subr.mxu0 0.0
      %316 = vmatpush1.msra.mxu0 0.0
      %317 = vmatprep.subr.mxu0 0.0
      %318 = vmatpush1.msra.mxu0 0.0
      %319 = vmatprep.subr.mxu0 0.0
      %320 = vmatpush1.msra.mxu0 0.0
      %321 = vmatprep.subr.mxu0 0.0
      %322 = vmatpush1.msra.mxu0 0.0
      %323 = vmatprep.subr.mxu0 0.0
      %324 = vmatpush1.msra.mxu0 0.0
      %325 = vmatprep.subr.mxu0 0.0
      %326 = vmatpush1.msra.mxu0 0.0
      %327 = vmatprep.subr.mxu0 0.0
      %328 = vmatpush1.msra.mxu0 %v242
      %329 = vmatprep.subr.mxu0 0.0
      %330 = vmatpush1.msra.mxu0 %v241
      %331 = vmatprep.subr.mxu0 0.0
      %332 = vmatpush2.msra.mxu0 0.0
      %333 = vmatprep.subr.mxu0 0.0
      %334 = vmatpush2.msra.mxu0 0.0
      %335 = vmatprep.subr.mxu0 0.0
      %336 = vmatpush2.msra.mxu0 0.0
      %337 = vmatprep.subr.mxu0 0.0
      %338 = vmatpush2.msra.mxu0 0.0
      %339 = vmatprep.subr.mxu0 0.0
      %340 = vmatpush2.msra.mxu0 0.0
      %341 = vmatprep.subr.mxu0 0.0
      %342 = vmatpush2.msra.mxu0 0.0
      %343 = vmatprep.subr.mxu0 0.0
      %344 = vmatpush2.msra.mxu0 0.0
      %345 = vmatprep.subr.mxu0 0.0
      %346 = vmatpush2.msra.mxu0 0.0
      %347 = vmatprep.subr.mxu0 0.0
      %348 = vmatpush2.msra.mxu0 0.0
      %349 = vmatprep.subr.mxu0 0.0
      %350 = vmatpush2.msra.mxu0 0.0
      %351 = vmatprep.subr.mxu0 0.0
      %352 = vmatpush2.msra.mxu0 0.0
      %353 = vmatprep.subr.mxu0 0.0
      %354 = vmatpush2.msra.mxu0 0.0
      %355 = vmatprep.subr.mxu0 0.0
      %356 = vmatpush2.msra.mxu0 0.0
      %357 = vmatprep.subr.mxu0 0.0
      %358 = vmatpush2.msra.mxu0 0.0
      %359 = vmatprep.subr.mxu0 0.0
      %360 = vmatpush2.msra.mxu0 0.0
      %361 = vmatprep.subr.mxu0 0.0
      %362 = vmatpush2.msra.mxu0 0.0
      %363 = vmatprep.mubr.f32.mxu0 0.0
      %364 = vmatmul.mubr.f32.gmra.mxu0 %v252
      %v365 = vpop.f32.mrf.mxu0
      %v366 = vadd.f32 %v248, %v365
      %v367 = vpop.f32.mrf.mxu0
      %368 = vmatprep.mubr.f32.mxu0 0.0
      %369 = vmatmul.mubr.f32.gmra.mxu0 %v255
      %v370 = vpop.f32.mrf.mxu0
      %v371 = vadd.f32 %v248, %v370
      %v372 = vpop.f32.mrf.mxu0
      %373 = vmatprep.mubr.f32.mxu0 0.0
      %374 = vmatmul.mubr.f32.gmra.mxu0 %v258
      %v375 = vpop.f32.mrf.mxu0
      %v376 = vadd.f32 %v248, %v375
      %v377 = vpop.f32.mrf.mxu0
      %378 = vmatprep.mubr.f32.mxu0 0.0
      %379 = vmatmul.mubr.f32.gmra.mxu0 %v261
      %v380 = vpop.f32.mrf.mxu0
      %v381 = vadd.f32 %v248, %v380
      %v382 = vpop.f32.mrf.mxu0
      %383 = vmatprep.mubr.f32.mxu0 0.0
      %384 = vmatmul.mubr.f32.gmra.mxu0 %v264
      %v385 = vpop.f32.mrf.mxu0
      %v386 = vadd.f32 %v248, %v385
      %v387 = vpop.f32.mrf.mxu0
      %388 = vmatprep.mubr.f32.mxu0 0.0
      %389 = vmatmul.mubr.f32.gmra.mxu0 %v267
      %v390 = vpop.f32.mrf.mxu0
      %v391 = vadd.f32 %v248, %v390
      %v392 = vpop.f32.mrf.mxu0
      %393 = vmatprep.mubr.f32.mxu0 0.0
      %394 = vmatmul.mubr.f32.gmra.mxu0 %v270
      %v395 = vpop.f32.mrf.mxu0
      %v396 = vadd.f32 %v248, %v395
      %v397 = vpop.f32.mrf.mxu0
      %398 = vmatprep.mubr.f32.mxu0 0.0
      %399 = vmatmul.mubr.f32.gmra.mxu0 %v273
      %v400 = vpop.f32.mrf.mxu0
      %v401 = vadd.f32 %v248, %v400
      %v402 = vpop.f32.mrf.mxu0
      %403 = vmatprep.mubr.f32.mxu0 0.0
      %404 = vmatmul.mubr.f32.gmra.mxu0 %v276
      %v405 = vpop.f32.mrf.mxu0
      %v406 = vadd.f32 %v248, %v405
      %v407 = vpop.f32.mrf.mxu0
      %408 = vmatprep.mubr.f32.mxu0 0.0
      %409 = vmatmul.mubr.f32.gmra.mxu0 %v279
      %v410 = vpop.f32.mrf.mxu0
      %v411 = vadd.f32 %v248, %v410
      %v412 = vpop.f32.mrf.mxu0
      %413 = vmatprep.mubr.f32.mxu0 0.0
      %414 = vmatmul.mubr.f32.gmra.mxu0 %v282
      %v415 = vpop.f32.mrf.mxu0
      %v416 = vadd.f32 %v248, %v415
      %v417 = vpop.f32.mrf.mxu0
      %418 = vmatprep.mubr.f32.mxu0 0.0
      %419 = vmatmul.mubr.f32.gmra.mxu0 %v285
      %v420 = vpop.f32.mrf.mxu0
      %v421 = vadd.f32 %v248, %v420
      %v422 = vpop.f32.mrf.mxu0
      %423 = vmatprep.mubr.f32.mxu0 0.0
      %424 = vmatmul.mubr.f32.gmra.mxu0 %v288
      %v425 = vpop.f32.mrf.mxu0
      %v426 = vadd.f32 %v248, %v425
      %v427 = vpop.f32.mrf.mxu0
      %428 = vmatprep.mubr.f32.mxu0 0.0
      %429 = vmatmul.mubr.f32.gmra.mxu0 %v291
      %v430 = vpop.f32.mrf.mxu0
      %v431 = vadd.f32 %v248, %v430
      %v432 = vpop.f32.mrf.mxu0
      %433 = vmatprep.mubr.f32.mxu0 0.0
      %434 = vmatmul.mubr.f32.gmra.mxu0 %v294
      %v435 = vpop.f32.mrf.mxu0
      %v436 = vadd.f32 %v248, %v435
      %v437 = vpop.f32.mrf.mxu0
      %438 = vmatprep.mubr.f32.mxu0 0.0
      %439 = vmatmul.mubr.f32.gmra.mxu0 %v297
      %v440 = vpop.f32.mrf.mxu0
      %v441 = vadd.f32 %v248, %v440
      %v442 = vpop.f32.mrf.mxu0
      %443 = vdwg.mxu0
      %vm444 = vcmask 261120
      %445 = vst.msk [vmem:[%s223] sm:$0xff] %vm444, %v366
      %446 = vst.msk [vmem:[%s223 + $0x8] sm:$0xff] %vm444, %v371
      %447 = vst.msk [vmem:[%s223 + $0x10] sm:$0xff] %vm444, %v376
      %448 = vst.msk [vmem:[%s223 + $0x18] sm:$0xff] %vm444, %v381
      %449 = vst.msk [vmem:[%s223 + $0x20] sm:$0xff] %vm444, %v386
      %450 = vst.msk [vmem:[%s223 + $0x28] sm:$0xff] %vm444, %v391
      %451 = vst.msk [vmem:[%s223 + $0x30] sm:$0xff] %vm444, %v396
      %452 = vst.msk [vmem:[%s223 + $0x38] sm:$0xff] %vm444, %v401
      %453 = vst.msk [vmem:[%s223 + $0x40] sm:$0xff] %vm444, %v406
      %454 = vst.msk [vmem:[%s223 + $0x48] sm:$0xff] %vm444, %v411
      %455 = vst.msk [vmem:[%s223 + $0x50] sm:$0xff] %vm444, %v416
      %456 = vst.msk [vmem:[%s223 + $0x58] sm:$0xff] %vm444, %v421
      %457 = vst.msk [vmem:[%s223 + $0x60] sm:$0xff] %vm444, %v426
      %458 = vst.msk [vmem:[%s223 + $0x68] sm:$0xff] %vm444, %v431
      %459 = vst.msk [vmem:[%s223 + $0x70] sm:$0xff] %vm444, %v436
      %460 = vst.msk [vmem:[%s223 + $0x78] sm:$0xff] %vm444, %v441
      %s461 = smul.u32 16, %s18
      %p462 = scmp.lt.s32.totalorder %s461, 31
      %s463 = scalar_select %p462, %s461, 31
      %p464 = scmp.lt.s32.totalorder %s19, 0
      %s465 = scalar_select %p464, %s19, 0
      %s466 = sadd.s32 %s465, %s463
      %s467 = smul.addr %s466, 8
      %s468 = scalar_lea.vmem %s3, %s467
      // Predicated region
      $region33: #{tpu_custom_call.1} parent=31 // pred_check
        %p469 = pneg %p124
      $region34: #{tpu_custom_call.1} parent=31 // pred_check_branch
        %471 = sbr.rel (%p469) target = $region36
      $region35: #{tpu_custom_call.1} parent=31 // pred_region
        %s472 = smul.u32 16, %s18
      $region36: #{tpu_custom_call.1} parent=31 // pred_fallthru
        _
    $region32: #{tpu_custom_call.1} parent=5 // pred_fallthru
      _
    %p473 = scmp.le.s32.totalorder 2, %s9
    // Predicated region
    $region37: #{tpu_custom_call.1} parent=5 // pred_check
      %p474 = pneg %p473
    $region38: #{tpu_custom_call.1} parent=5 // pred_check_branch
      %476 = sbr.rel (%p474) target = $region40
    $region39: #{tpu_custom_call.1} parent=5 // pred_region
      %s477 = ssub.s32 %s9, 2
      // Predicated region
      $region41: #{tpu_custom_call.1} parent=39 // pred_check
        %p478 = pneg %p130
      $region42: #{tpu_custom_call.1} parent=39 // pred_check_branch
        %480 = sbr.rel (%p478) target = $region44
      $region43: #{tpu_custom_call.1} parent=39 // pred_region
        %s481 = smul.u32 16, %s20
        %p482 = scmp.lt.s32.totalorder %s481, 31
        %s483 = scalar_select %p482, %s481, 31
        %p484 = scmp.lt.s32.totalorder %s21, 0
        %s485 = scalar_select %p484, %s21, 0
        %s486 = sadd.s32 %s485, %s483
        %s487 = smul.addr %s486, 8
        %s488 = scalar_lea.vmem %s3, %s487
      $region44: #{tpu_custom_call.1} parent=39 // pred_fallthru
        _
    $region40: #{tpu_custom_call.1} parent=5 // pred_fallthru
      _
  $region6: #{tpu_custom_call.1} parent=0 // loop_footer
    %s13 = sadd.s32 1, %s9
  $region7: #{tpu_custom_call.1} parent=0 // loop_footer_branch
    %8 = sbr.rel target = $region3
  $region8: #{tpu_custom_call.1} parent=0 // loop_exit
    _

</llo_original>
